<compile_context>
chip_gen: v7x
topology: tpu7x:2x2x1
jax: 0.10.0
libtpu: 0.0.40
codegen_flags: <defaults>
</compile_context>

<pallas_src>
import functools

import jax
import jax.numpy as jnp
from jax.experimental import pallas as pl
from jax.experimental.pallas import tpu as pltpu


# Conservative VMEM sizing that fits every generation (v7x is the tightest at
# 64 MiB physical / 32 MiB default-scoped per TensorCore).  v5e/v6e (128 MiB)
# simply get extra headroom.
_VMEM_LIMIT_BYTES = 32 * 1024 * 1024
_TILE_BUDGET_BYTES = 24 * 1024 * 1024   # for the 6 pipelined (T, H) buffers
_MAX_ROW_TILE = 2048                    # >=512 rows already ~85% of HBM roofline


def _addnorm_kernel(x_ref, res_ref, g_ref, b_ref, o_ref, *, eps):
    # dropout(0.3) == identity in eval mode.
    s = x_ref[...] + res_ref[...]                       # (T, H)
    mean = jnp.mean(s, axis=-1, keepdims=True)
    c = s - mean
    var = jnp.mean(c * c, axis=-1, keepdims=True)
    inv = jax.lax.rsqrt(var + eps)                      # EUP rsqrt, off the VPU
    o_ref[...] = (c * inv * g_ref[...] + b_ref[...]).astype(o_ref.dtype)


def _choose_row_tile(n_rows, hidden, itemsize):
    """Largest sublane-aligned row tile whose pipelined copies fit the budget.

    Per grid step: 2 streamed inputs + 1 output, each double-buffered
    -> 6 * T * H * itemsize bytes of VMEM buffers (gamma/beta are negligible).
    """
    bytes_per_row = 6 * hidden * itemsize
    t = _TILE_BUDGET_BYTES // max(bytes_per_row, 1)
    t = min(t, n_rows, _MAX_ROW_TILE)
    t = max(8, (t // 8) * 8)                            # sublane multiple of 8
    return int(t)


def addnorm(x, residual, gamma, beta, *, eps=1e-5, row_tile=None):
    """LayerNorm(dropout(x) + residual) over the last axis.

    x, residual: (..., H);  gamma, beta: (H,).
    Row-tiled over the flattened leading axes.
    """
    orig_shape = x.shape
    H = orig_shape[-1]
    n_rows = 1
    for d in orig_shape[:-1]:
        n_rows *= d

    x2 = x.reshape(n_rows, H)
    r2 = residual.reshape(n_rows, H)

    if row_tile is None:
        row_tile = _choose_row_tile(n_rows, H, x2.dtype.itemsize)
    row_tile = max(1, min(int(row_tile), n_rows))
    if row_tile < n_rows:
        # When actually tiling, keep the sublane dim a multiple of 8.
        row_tile = max(8, (row_tile // 8) * 8)

    # Pad rows so the grid divides evenly; padded rows are finite
    # (rsqrt(0 + eps)) and sliced away afterwards.
    n_pad = (-n_rows) % row_tile
    if n_pad:
        x2 = jnp.pad(x2, ((0, n_pad), (0, 0)))
        r2 = jnp.pad(r2, ((0, n_pad), (0, 0)))
    n_total = n_rows + n_pad
    grid = (n_total // row_tile,)

    # NOTE: at production H >= 128 the (T, H) tiles are lane-dense (unmasked
    # vst); for toy H < 128 we accept the masked-store lane waste.
    kernel = functools.partial(_addnorm_kernel, eps=eps)
    out = pl.pallas_call(
        kernel,
        out_shape=jax.ShapeDtypeStruct((n_total, H), x.dtype),
        grid_spec=pltpu.PrefetchScalarGridSpec(
            num_scalar_prefetch=0,
            grid=grid,
            in_specs=[
                pl.BlockSpec((row_tile, H), lambda i: (i, 0)),   # x
                pl.BlockSpec((row_tile, H), lambda i: (i, 0)),   # residual
                pl.BlockSpec((1, H), lambda i: (0, 0)),          # gamma
                pl.BlockSpec((1, H), lambda i: (0, 0)),          # beta
            ],
            out_specs=pl.BlockSpec((row_tile, H), lambda i: (i, 0)),
        ),
        compiler_params=pltpu.CompilerParams(
            # Rows are independent: "parallel" shards the grid across v7x's two
            # TensorCores and is a no-op on single-TC v5e/v6e.
            dimension_semantics=("parallel",),
            vmem_limit_bytes=_VMEM_LIMIT_BYTES,
        ),
    )(x2, r2,
      gamma.reshape(1, H).astype(x.dtype),
      beta.reshape(1, H).astype(x.dtype))

    if n_pad:
        out = out[:n_rows]
    return out.reshape(orig_shape)


def _addnorm_reference(x, residual, gamma, beta, eps=1e-5):
    s = x + residual
    mean = s.mean(-1, keepdims=True)
    var = ((s - mean) ** 2).mean(-1, keepdims=True)
    return (s - mean) / jnp.sqrt(var + eps) * gamma + beta


# ----------------------------------------------------------------------------
if __name__ == "__main__":
    B, S, H = 2, 8, 32
    keys = jax.random.split(jax.random.PRNGKey(0), 4)

    x = jax.random.normal(keys[0], (B, S, H), jnp.float32)
    resid = jax.random.normal(keys[1], (B, S, H), jnp.float32)
    gamma = 1.0 + 0.1 * jax.random.normal(keys[2], (H,), jnp.float32)
    beta = 0.1 * jax.random.normal(keys[3], (H,), jnp.float32)

    ref = _addnorm_reference(x, resid, gamma, beta)

    # Auto-sized tile (single step at this toy size) and a forced multi-step
    # row-tiled grid (row_tile=8 -> grid=(2,)) to exercise the pipelined path.
    for rt in (None, 8):
        out = jax.block_until_ready(addnorm(x, resid, gamma, beta, row_tile=rt))
        assert out.shape == (B, S, H)
        assert jnp.allclose(out, ref, rtol=1e-5, atol=1e-5), \
            f"addnorm mismatch (row_tile={rt})"

    # Padding path: row count (3*5=15) not divisible by the tile (8).
    B2, S2 = 3, 5
    x2 = jax.random.normal(keys[0], (B2, S2, H), jnp.float32)
    r2 = jax.random.normal(keys[1], (B2, S2, H), jnp.float32)
    out2 = jax.block_until_ready(addnorm(x2, r2, gamma, beta, row_tile=8))
    ref2 = _addnorm_reference(x2, r2, gamma, beta)
    assert out2.shape == (B2, S2, H)
    assert jnp.allclose(out2, ref2, rtol=1e-5, atol=1e-5), "addnorm mismatch (padded)"

    print("KERNEL_OK")
</pallas_src>

<mosaic_0001>
module attributes {stable_mosaic.version = 11 : i64} {
  func.func @_addnorm_kernel(%arg0: i32, %arg1: memref<16x32xf32, #tpu.memory_space<vmem>>, %arg2: memref<16x32xf32, #tpu.memory_space<vmem>>, %arg3: memref<1x32xf32, #tpu.memory_space<vmem>>, %arg4: memref<1x32xf32, #tpu.memory_space<vmem>>, %arg5: memref<16x32xf32, #tpu.memory_space<vmem>>) attributes {dimension_semantics = [#tpu.dimension_semantics<parallel>], iteration_bounds = array<i64: 1>, scalar_prefetch = 0 : i64, scratch_operands = 0 : i64, tpu.core_type = #tpu.core_type<tc>, window_params = [{transform_indices = @transform_0, window_bounds = array<i64: 16, 32>}, {transform_indices = @transform_1, window_bounds = array<i64: 16, 32>}, {pipeline_mode = #tpu.pipeline_mode<synchronous>, transform_indices = @transform_2, window_bounds = array<i64: 1, 32>}, {pipeline_mode = #tpu.pipeline_mode<synchronous>, transform_indices = @transform_3, window_bounds = array<i64: 1, 32>}, {transform_indices = @transform_4, window_bounds = array<i64: 16, 32>}]} {
    %c0 = arith.constant 0 : index
    %c0_0 = arith.constant 0 : index
    %0 = vector.load %arg1[%c0, %c0_0] : memref<16x32xf32, #tpu.memory_space<vmem>>, vector<16x32xf32>
    %c0_1 = arith.constant 0 : index
    %c0_2 = arith.constant 0 : index
    %1 = vector.load %arg2[%c0_1, %c0_2] : memref<16x32xf32, #tpu.memory_space<vmem>>, vector<16x32xf32>
    %2 = arith.addf %0, %1 : vector<16x32xf32>
    %cst = arith.constant dense<0.000000e+00> : vector<16xf32>
    %3 = vector.multi_reduction <add>, %2, %cst [1] : vector<16x32xf32> to vector<16xf32>
    %4 = vector.shape_cast %3 : vector<16xf32> to vector<16x1xf32>
    %cst_3 = arith.constant 3.200000e+01 : f32
    %5 = vector.broadcast %cst_3 : f32 to vector<16x1xf32>
    %6 = arith.divf %4, %5 : vector<16x1xf32>
    %7 = vector.broadcast %6 : vector<16x1xf32> to vector<16x32xf32>
    %8 = arith.subf %2, %7 : vector<16x32xf32>
    %9 = arith.mulf %8, %8 : vector<16x32xf32>
    %cst_4 = arith.constant dense<0.000000e+00> : vector<16xf32>
    %10 = vector.multi_reduction <add>, %9, %cst_4 [1] : vector<16x32xf32> to vector<16xf32>
    %11 = vector.shape_cast %10 : vector<16xf32> to vector<16x1xf32>
    %cst_5 = arith.constant 3.200000e+01 : f32
    %12 = vector.broadcast %cst_5 : f32 to vector<16x1xf32>
    %13 = arith.divf %11, %12 : vector<16x1xf32>
    %cst_6 = arith.constant 9.99999974E-6 : f32
    %14 = vector.broadcast %cst_6 : f32 to vector<16x1xf32>
    %15 = arith.addf %13, %14 : vector<16x1xf32>
    %16 = math.rsqrt %15 : vector<16x1xf32>
    %17 = vector.broadcast %16 : vector<16x1xf32> to vector<16x32xf32>
    %18 = arith.mulf %8, %17 : vector<16x32xf32>
    %c0_7 = arith.constant 0 : index
    %c0_8 = arith.constant 0 : index
    %19 = vector.load %arg3[%c0_7, %c0_8] : memref<1x32xf32, #tpu.memory_space<vmem>>, vector<1x32xf32>
    %20 = vector.broadcast %19 : vector<1x32xf32> to vector<16x32xf32>
    %21 = arith.mulf %18, %20 : vector<16x32xf32>
    %c0_9 = arith.constant 0 : index
    %c0_10 = arith.constant 0 : index
    %22 = vector.load %arg4[%c0_9, %c0_10] : memref<1x32xf32, #tpu.memory_space<vmem>>, vector<1x32xf32>
    %23 = vector.broadcast %22 : vector<1x32xf32> to vector<16x32xf32>
    %24 = arith.addf %21, %23 : vector<16x32xf32>
    %c0_11 = arith.constant 0 : index
    %c0_12 = arith.constant 0 : index
    %25 = vector.load %arg5[%c0_11, %c0_12] : memref<16x32xf32, #tpu.memory_space<vmem>>, vector<16x32xf32>
    tpu.vector_store %arg5[%c0_11, %c0_12], %24 {strides = array<i32>} : memref<16x32xf32, #tpu.memory_space<vmem>>, vector<16x32xf32>,
    return
  }
  func.func @transform_0(%arg0: i32) -> (i32, i32) {
    %c0_i32 = arith.constant 0 : i32
    %c0_i32_0 = arith.constant 0 : i32
    return %arg0, %c0_i32 : i32, i32
  }
  func.func @transform_1(%arg0: i32) -> (i32, i32) {
    %c0_i32 = arith.constant 0 : i32
    %c0_i32_0 = arith.constant 0 : i32
    return %arg0, %c0_i32 : i32, i32
  }
  func.func @transform_2(%arg0: i32) -> (i32, i32) {
    %c0_i32 = arith.constant 0 : i32
    %c0_i32_0 = arith.constant 0 : i32
    %c0_i32_1 = arith.constant 0 : i32
    return %c0_i32, %c0_i32_0 : i32, i32
  }
  func.func @transform_3(%arg0: i32) -> (i32, i32) {
    %c0_i32 = arith.constant 0 : i32
    %c0_i32_0 = arith.constant 0 : i32
    %c0_i32_1 = arith.constant 0 : i32
    return %c0_i32, %c0_i32_0 : i32, i32
  }
  func.func @transform_4(%arg0: i32) -> (i32, i32) {
    %c0_i32 = arith.constant 0 : i32
    %c0_i32_0 = arith.constant 0 : i32
    return %arg0, %c0_i32 : i32, i32
  }
}

</mosaic_0001>

<llo_original>
// kernel: tpu_custom_call.1
$region0: #{tpu_custom_call.1}
  #allocation0 [shape = 'u32[]', space=smem, size = 0x4, offset = 0x4, fixed_abs, tag = 'smem constant byte address 0x4 - core index']
  #allocation1 [shape = 'u32[144,128]{1,0:T(1,128)}', space=vmem, size = 0x12000, scoped, tag = 'internal scratch']
  %s0 = inlined_call_operand.hbm [shape: f32[16,32], index: 0, kind: input, shape index: {}]
  %s1 = inlined_call_operand.hbm [shape: f32[16,32], index: 1, kind: input, shape index: {}]
  %s2 = inlined_call_operand.vmem [shape: f32[1,32], index: 2, kind: input, shape index: {}]
  %s3 = inlined_call_operand.vmem [shape: f32[1,32], index: 3, kind: input, shape index: {}]
  %s4 = inlined_call_operand.hbm [shape: f32[16,32], index: 4, kind: output, shape index: {}]
  %s5 = sld [smem:[#allocation0]]
  $region34: #{tpu_custom_call.1} parent=0
    _
  %s7 = ssub.s32 1, %s5
  %s8 = scalar_select 0, %s7, %s5
  $region1: #{tpu_custom_call.1} parent=0
    #allocation2 [shape = 'u8[8192]{0}', space=vmem, size = 0x2000, scoped, tag = 'input window, operand 0, single buffered']
    #allocation3 [shape = 's32[1]{0}', space=sflag, size = 0x4, scoped, tag = 'scoped memory for tpu_custom_call.1']
    #allocation4 [shape = 's32[1]{0}', space=sflag, size = 0x4, scoped, tag = 'scoped memory for tpu_custom_call.1']
    #allocation5 [shape = 'u8[8192]{0}', space=vmem, size = 0x2000, scoped, tag = 'input window, operand 1, single buffered']
    #allocation6 [shape = 's32[1]{0}', space=sflag, size = 0x4, scoped, tag = 'scoped memory for tpu_custom_call.1']
    #allocation7 [shape = 'u8[8192]{0}', space=vmem, size = 0x2000, scoped, tag = 'output window, operand 0, single buffered']
    %9 = vsyncpa [#allocation3], 0
    %10 = vsyncpa [#allocation6], 0
    %11 = vsyncpa [#allocation4], 0
    // Predicated region
    $region2: #{tpu_custom_call.1} parent=1 // pred_check
      _
    $region3: #{tpu_custom_call.1} parent=1 // pred_check_branch
      %13 = sbr.rel (0) target = $region5
    $region4: #{tpu_custom_call.1} parent=1 // pred_region
      %s15 = ssub.s32 256, 256
      %16 = vsyncadd [#allocation3], %s15
      %s17 = sshll.u32 [#allocation2], 4
      %s18 = int_to_ptr.vmem [resolvable:$true] %s17
      %23 = dma.hbm_to_vmem [thread:$0]  %s0, 256, %s18, [#allocation3], 128, 128, 8
    $region5: #{tpu_custom_call.1} parent=1 // pred_fallthru
      _
    // Predicated region
    $region6: #{tpu_custom_call.1} parent=1 // pred_check
      _
    $region7: #{tpu_custom_call.1} parent=1 // pred_check_branch
      %25 = sbr.rel (0) target = $region9
    $region8: #{tpu_custom_call.1} parent=1 // pred_region
      %s27 = ssub.s32 256, 256
      %28 = vsyncadd [#allocation6], %s27
      %s29 = sshll.u32 [#allocation5], 4
      %s30 = int_to_ptr.vmem [resolvable:$true] %s29
      %35 = dma.hbm_to_vmem [thread:$0]  %s1, 256, %s30, [#allocation6], 128, 128, 8
    $region9: #{tpu_custom_call.1} parent=1 // pred_fallthru
      _
    // Predicated region
    $region10: #{tpu_custom_call.1} parent=1 // pred_check
      _
    $region11: #{tpu_custom_call.1} parent=1 // pred_check_branch
      %37 = sbr.rel (0) target = $region13
    $region12: #{tpu_custom_call.1} parent=1 // pred_region
      _
    $region13: #{tpu_custom_call.1} parent=1 // pred_fallthru
      _
    // Predicated region
    $region14: #{tpu_custom_call.1} parent=1 // pred_check
      _
    $region15: #{tpu_custom_call.1} parent=1 // pred_check_branch
      %39 = sbr.rel (0) target = $region17
    $region16: #{tpu_custom_call.1} parent=1 // pred_region
      _
    $region17: #{tpu_custom_call.1} parent=1 // pred_fallthru
      _
    // Predicated region
    $region18: #{tpu_custom_call.1} parent=1 // pred_check
      _
    $region19: #{tpu_custom_call.1} parent=1 // pred_check_branch
      %41 = sbr.rel (0) target = $region21
    $region20: #{tpu_custom_call.1} parent=1 // pred_region
      %42 = dma.done [#allocation3], 256
    $region21: #{tpu_custom_call.1} parent=1 // pred_fallthru
      _
    // Predicated region
    $region22: #{tpu_custom_call.1} parent=1 // pred_check
      _
    $region23: #{tpu_custom_call.1} parent=1 // pred_check_branch
      %44 = sbr.rel (0) target = $region25
    $region24: #{tpu_custom_call.1} parent=1 // pred_region
      %45 = dma.done [#allocation6], 256
    $region25: #{tpu_custom_call.1} parent=1 // pred_fallthru
      _
    %v46 = vld [vmem:[#allocation2] sm:$0xff]
    %v47 = vld [vmem:[#allocation2 + $0x8] sm:$0xff]
    %v48 = vld [vmem:[#allocation5] sm:$0xff]
    %v49 = vld [vmem:[#allocation5 + $0x8] sm:$0xff]
    %v50 = vadd.f32 %v46, %v48
    %v51 = vadd.f32 %v47, %v49
    %vm52 = vcmask 261120
    %v53 = vsel %vm52, %v50, 0.0
    %54 = vadd.xlane.f32.xlu0 %v53
    %v55 = vpop.xlane.xlu0 %54
    %v56 = vsel %vm52, %v51, 0.0
    %57 = vadd.xlane.f32.xlu0 %v56
    %v58 = vpop.xlane.xlu0 %57
    %v59 = vrcp.pop 32.0
    %v60 = vmul.f32 %v55, %v59
    %v61 = vmul.f32 %v58, %v59
    %v62 = vsub.f32 %v50, %v60
    %v63 = vsub.f32 %v51, %v61
    %v64 = vmul.f32 %v62, %v62
    %v65 = vmul.f32 %v63, %v63
    %v66 = vsel %vm52, %v64, 0.0
    %67 = vadd.xlane.f32.xlu0 %v66
    %v68 = vpop.xlane.xlu0 %67
    %v69 = vsel %vm52, %v65, 0.0
    %70 = vadd.xlane.f32.xlu0 %v69
    %v71 = vpop.xlane.xlu0 %70
    %v72 = vmul.f32 %v68, %v59
    %v73 = vmul.f32 %v71, %v59
    %v74 = vadd.f32 %v72, 1e-05
    %v75 = vadd.f32 %v73, 1e-05
    %v76 = vrsqrt.pop %v74
    %v77 = vrsqrt.pop %v75
    %v78 = vmul.f32 %v62, %v76
    %v79 = vmul.f32 %v63, %v77
    %v80 = vld [vmem:[%s2] sm:$0x1]
    %v82 = vlaneseq
    %v83 = vshrl.u32 %v82, 7
    %v84 = vsub.s32 0, %v83
    %v85 = vrot.slane %v80, %v84
    %v87 = vmul.f32 %v78, %v85
    %v88 = vmul.f32 %v79, %v85
    %v89 = vld [vmem:[%s3] sm:$0x1]
    %v91 = vlaneseq
    %v92 = vshrl.u32 %v91, 7
    %v93 = vsub.s32 0, %v92
    %v94 = vrot.slane %v89, %v93
    %v96 = vadd.f32 %v87, %v94
    %v97 = vadd.f32 %v88, %v94
    %98 = vst.msk [vmem:[#allocation7] sm:$0xff] %vm52, %v96
    %99 = vst.msk [vmem:[#allocation7 + $0x8] sm:$0xff] %vm52, %v97
    // Predicated region
    $region26: #{tpu_custom_call.1} parent=1 // pred_check
      _
    $region27: #{tpu_custom_call.1} parent=1 // pred_check_branch
      %101 = sbr.rel (0) target = $region29
    $region28: #{tpu_custom_call.1} parent=1 // pred_region
      %s103 = ssub.s32 256, 256
      %104 = vsyncadd [#allocation4], %s103
      %s105 = sshll.u32 [#allocation7], 4
      %s106 = int_to_ptr.vmem [resolvable:$true] %s105
      %111 = dma.vmem_to_hbm [thread:$0]  %s106, 256, %s4, [#allocation4], 128, 128, 8
    $region29: #{tpu_custom_call.1} parent=1 // pred_fallthru
      _
    // Predicated region
    $region30: #{tpu_custom_call.1} parent=1 // pred_check
      _
    $region31: #{tpu_custom_call.1} parent=1 // pred_check_branch
      %113 = sbr.rel (0) target = $region33
    $region32: #{tpu_custom_call.1} parent=1 // pred_region
      %114 = dma.done [#allocation4], 256
    $region33: #{tpu_custom_call.1} parent=1 // pred_fallthru
      _
    %115 = vsyncpa [#allocation3], 1
    %116 = vsyncpa [#allocation6], 1
    %117 = vsyncpa [#allocation4], 1

</llo_original>
